<compile_context>
chip_gen: v5e
topology: v5e:2x2
jax: 0.10.0
libtpu: 0.0.40
codegen_flags: <defaults>
</compile_context>

<pallas_src>
import functools
import math

import numpy as np
import jax
import jax.numpy as jnp
from jax.experimental import pallas as pl
from jax.experimental.pallas import tpu as pltpu

LANE = 128


def _round_up(x, m):
    return (x + m - 1) // m * m


def _sage_layer_kernel(a_ref, x_nbr_ref, x_self_ref, inv_deg_ref, wl_ref, wr_ref,
                       b_ref, out_ref, acc_ref, *, apply_relu):
    """One SAGEConv layer at grid point (row tile i, neighbor tile k).

    a_ref      : [tn, tk]    int8  unnormalized adjacency block (edge counts)
    x_nbr_ref  : [tk, Cin]   bf16  neighbor-feature block (aggregation operand)
    x_self_ref : [tn, Cin]   bf16  this row tile's own features (root term)
    inv_deg_ref: [tn, 1]     f32   1/in-degree (0 for isolated nodes)
    wl_ref     : [Cin, Cout] bf16  lin_l weight (pre-transposed, lane padded)
    wr_ref     : [Cin, Cout] bf16  lin_r weight
    b_ref      : [1, Cout]   f32   lin_l bias
    out_ref    : [tn, Cout]        lane-dense output tile
    acc_ref    : [tn, Cin]   f32   aggregation accumulator (VMEM scratch)
    """
    k = pl.program_id(1)

    @pl.when(k == 0)
    def _():
        acc_ref[...] = jnp.zeros_like(acc_ref)

    # Partial mean-aggregation: int8 counts upcast to bf16 right before the MXU
    # dot (A travels HBM->VMEM at 1 byte/elem), f32 accumulation in VMEM.
    a_tile = a_ref[...].astype(jnp.bfloat16)
    acc_ref[...] += jnp.dot(a_tile, x_nbr_ref[...],
                            preferred_element_type=jnp.float32)

    @pl.when(k == pl.num_programs(1) - 1)
    def _():
        agg = (acc_ref[...] * inv_deg_ref[...]).astype(jnp.bfloat16)
        # Two accumulating MXU dots (no lane-axis concat temp):
        #   y = agg @ W_l + x @ W_r + b_l
        y = jnp.dot(agg, wl_ref[...], preferred_element_type=jnp.float32)
        y = y + jnp.dot(x_self_ref[...], wr_ref[...],
                        preferred_element_type=jnp.float32)
        y = y + b_ref[...]
        if apply_relu:
            y = jnp.maximum(y, 0.0)
        out_ref[...] = y.astype(out_ref.dtype)


def _sage_layer(a, x, inv_deg, wl, wr, b, *, apply_relu, out_dtype, tn, tk):
    n_p = a.shape[0]
    cin_p = x.shape[1]
    cout_p = wl.shape[1]
    grid = (n_p // tn, n_p // tk)

    # Double-buffered inputs/outputs + f32 accumulator, with headroom; capped
    # well below v7x's 64 MiB physical VMEM.
    vmem_bytes = (
        2 * tn * tk * 1                     # A blocks (int8)
        + 2 * tk * cin_p * 2                # X neighbor blocks (bf16)
        + 2 * tn * cin_p * 2                # X self blocks (bf16)
        + 2 * tn * 4                        # inv_deg
        + 2 * 2 * cin_p * cout_p * 2        # W_l + W_r
        + 2 * cout_p * 4                    # bias
        + 2 * tn * cout_p * jnp.dtype(out_dtype).itemsize  # output
        + tn * cin_p * 4                    # accumulator scratch
    )
    vmem_limit = int(min(max(2 * vmem_bytes + (4 << 20), 16 << 20), 56 << 20))

    kernel = functools.partial(_sage_layer_kernel, apply_relu=apply_relu)
    return pl.pallas_call(
        kernel,
        out_shape=jax.ShapeDtypeStruct((n_p, cout_p), out_dtype),
        grid_spec=pltpu.PrefetchScalarGridSpec(
            num_scalar_prefetch=0,
            grid=grid,
            in_specs=[
                pl.BlockSpec((tn, tk), lambda i, k: (i, k)),         # A block
                pl.BlockSpec((tk, cin_p), lambda i, k: (k, 0)),      # X (neighbors)
                pl.BlockSpec((tn, cin_p), lambda i, k: (i, 0)),      # X (self rows)
                pl.BlockSpec((tn, 1), lambda i, k: (i, 0)),          # inv_deg
                pl.BlockSpec((cin_p, cout_p), lambda i, k: (0, 0)),  # W_l
                pl.BlockSpec((cin_p, cout_p), lambda i, k: (0, 0)),  # W_r
                pl.BlockSpec((1, cout_p), lambda i, k: (0, 0)),      # bias
            ],
            out_specs=pl.BlockSpec((tn, cout_p), lambda i, k: (i, 0)),
            scratch_shapes=[pltpu.VMEM((tn, cin_p), jnp.float32)],
        ),
        compiler_params=pltpu.CompilerParams(
            dimension_semantics=("parallel", "arbitrary"),  # rows across TCs, K serial
            vmem_limit_bytes=vmem_limit),
    )(a, x, x, inv_deg, wl, wr, b)


def _pad_weight(w, cin_p, cout_p):
    cin, cout = w.shape
    out = jnp.zeros((cin_p, cout_p), jnp.float32).at[:cin, :cout].set(w)
    return out.astype(jnp.bfloat16)


def _pad_bias(b, cout_p):
    return jnp.zeros((1, cout_p), jnp.float32).at[:, :b.shape[1]].set(b)


def graphsage_forward(x, edge_index, params, *, row_tile=256, k_tile=2048):
    """x: [N, Cin] float32; edge_index: [2, E] int32 (row 0 = src, row 1 = dst)."""
    n, in_ch = x.shape
    hid_ch = params["wl1"].shape[1]
    out_ch = params["wl2"].shape[1]

    # Row tile: multiple of 32 (int8 (32,128) packing; >= bf16 (16,128) min tile
    # for the layer-1 output). Keep row_tile >= 256 in production.
    tn = min(_round_up(row_tile, 32), _round_up(n, 32))
    # Neighbor (K) tile: lane dim of the A block -> multiple of 128.
    tk = min(_round_up(k_tile, LANE), _round_up(n, LANE))
    # Padded node count must be divisible by both tiles.
    n_p = _round_up(n, math.lcm(tn, tk))

    in_p = _round_up(in_ch, LANE)
    hid_p = _round_up(hid_ch, LANE)
    out_p = _round_up(out_ch, LANE)

    # Dense adjacency of edge counts scattered directly as int8 (single O(N^2)
    # write; 1 byte/elem in HBM, upcast to bf16 in-kernel). Degree comes from
    # edge_index (O(E)), no O(N^2) row-sum. Note: >127 duplicate edges for one
    # (dst, src) pair would overflow int8 -- not expected in practice.
    src, dst = edge_index[0], edge_index[1]
    a = jnp.zeros((n_p, n_p), jnp.int8).at[dst, src].add(
        jnp.ones_like(dst, jnp.int8))
    deg = jnp.zeros((n_p, 1), jnp.float32).at[dst, 0].add(1.0)
    inv_deg = jnp.where(deg > 0.0, 1.0 / deg, 0.0)
    # TODO(synk): for very large/sparse graphs replace the dense A blocks with a
    # CSR gather (scalar-prefetched row offsets + manual make_async_copy).

    x_p = jnp.zeros((n_p, in_p), jnp.bfloat16).at[:n, :in_ch].set(
        x.astype(jnp.bfloat16))

    wl1 = _pad_weight(params["wl1"], in_p, hid_p)
    wr1 = _pad_weight(params["wr1"], in_p, hid_p)
    b1 = _pad_bias(params["b1"], hid_p)
    wl2 = _pad_weight(params["wl2"], hid_p, out_p)
    wr2 = _pad_weight(params["wr2"], hid_p, out_p)
    b2 = _pad_bias(params["b2"], out_p)

    # Padded rows (>= n) become bias(+ReLU) after layer 1; harmless, since their
    # A columns are zero (no edges originate from padded nodes) and the final
    # output is sliced back to [:n].
    h = _sage_layer(a, x_p, inv_deg, wl1, wr1, b1,
                    apply_relu=True, out_dtype=jnp.bfloat16, tn=tn, tk=tk)
    out = _sage_layer(a, h, inv_deg, wl2, wr2, b2,
                      apply_relu=False, out_dtype=jnp.float32, tn=tn, tk=tk)
    return out[:n, :out_ch]


def init_params(key, in_channels, hidden_channels, out_channels):
    """Deterministic synthetic parameters. Linear weights stored as [C_in, C_out]."""
    ks = jax.random.split(key, 6)

    def lin(k, cin, cout):
        bound = 1.0 / jnp.sqrt(cin)
        return jax.random.uniform(k, (cin, cout), jnp.float32, -bound, bound)

    def bias(k, cin, cout):
        bound = 1.0 / jnp.sqrt(cin)
        return jax.random.uniform(k, (1, cout), jnp.float32, -bound, bound)

    return {
        "wl1": lin(ks[0], in_channels, hidden_channels),
        "wr1": lin(ks[1], in_channels, hidden_channels),
        "b1":  bias(ks[2], in_channels, hidden_channels),
        "wl2": lin(ks[3], hidden_channels, out_channels),
        "wr2": lin(ks[4], hidden_channels, out_channels),
        "b2":  bias(ks[5], hidden_channels, out_channels),
    }


def _graphsage_ref(x, edge_index, params):
    """Pure-JAX f32 reference with PyG SAGEConv mean-aggregation semantics."""
    n = x.shape[0]
    src, dst = edge_index[0], edge_index[1]
    a = jnp.zeros((n, n), jnp.float32).at[dst, src].add(1.0)
    deg = a.sum(axis=1, keepdims=True)
    a = a / jnp.where(deg > 0, deg, 1.0)

    def conv(xx, wl, wr, b):
        return (a @ xx) @ wl + b + xx @ wr

    h = jax.nn.relu(conv(x, params["wl1"], params["wr1"], params["b1"]))
    return conv(h, params["wl2"], params["wr2"], params["b2"])


if __name__ == "__main__":
    key = jax.random.PRNGKey(0)
    k_x, k_e, k_p = jax.random.split(key, 3)

    N, E = 64, 256
    IN_CH, HID_CH, OUT_CH = 16, 32, 8

    x = jax.random.normal(k_x, (N, IN_CH), jnp.float32)
    edge_index = jax.random.randint(k_e, (2, E), 0, N, jnp.int32)
    params = init_params(k_p, IN_CH, HID_CH, OUT_CH)

    # Toy tiles (production defaults: row_tile=256, k_tile=2048).
    out = graphsage_forward(x, edge_index, params, row_tile=32, k_tile=128)
    jax.block_until_ready(out)
    assert out.shape == (N, OUT_CH)

    ref = _graphsage_ref(x, edge_index, params)
    # Tolerance is dtype-induced (bf16 A/X/W with f32 accumulation), not a bug.
    np.testing.assert_allclose(np.asarray(out), np.asarray(ref), rtol=5e-2, atol=5e-2)
    print("KERNEL_OK")
</pallas_src>

<mosaic_0001>
module attributes {stable_mosaic.version = 11 : i64} {
  func.func @_sage_layer_kernel(%arg0: i32, %arg1: i32, %arg2: memref<32x128xi8, #tpu.memory_space<vmem>>, %arg3: memref<128x128xbf16, #tpu.memory_space<vmem>>, %arg4: memref<32x128xbf16, #tpu.memory_space<vmem>>, %arg5: memref<32x1xf32, #tpu.memory_space<vmem>>, %arg6: memref<128x128xbf16, #tpu.memory_space<vmem>>, %arg7: memref<128x128xbf16, #tpu.memory_space<vmem>>, %arg8: memref<1x128xf32, #tpu.memory_space<vmem>>, %arg9: memref<32x128xbf16, #tpu.memory_space<vmem>>, %arg10: memref<32x128xf32, #tpu.memory_space<vmem>>) attributes {dimension_semantics = [#tpu.dimension_semantics<parallel>, #tpu.dimension_semantics<arbitrary>], iteration_bounds = array<i64: 4, 1>, scalar_prefetch = 0 : i64, scratch_operands = 1 : i64, tpu.core_type = #tpu.core_type<tc>, window_params = [{transform_indices = @transform_0, window_bounds = array<i64: 32, 128>}, {transform_indices = @transform_1, window_bounds = array<i64: 128, 128>}, {transform_indices = @transform_2, window_bounds = array<i64: 32, 128>}, {transform_indices = @transform_3, window_bounds = array<i64: 32, 1>}, {pipeline_mode = #tpu.pipeline_mode<synchronous>, transform_indices = @transform_4, window_bounds = array<i64: 128, 128>}, {pipeline_mode = #tpu.pipeline_mode<synchronous>, transform_indices = @transform_5, window_bounds = array<i64: 128, 128>}, {pipeline_mode = #tpu.pipeline_mode<synchronous>, transform_indices = @transform_6, window_bounds = array<i64: 1, 128>}, {transform_indices = @transform_7, window_bounds = array<i64: 32, 128>}]} {
    %c0_i32 = arith.constant 0 : i32
    %0 = arith.cmpi eq, %arg1, %c0_i32 : i32
    %1 = arith.extui %0 : i1 to i32
    %c0_i32_0 = arith.constant 0 : i32
    %2 = arith.cmpi ne, %1, %c0_i32_0 : i32
    scf.if %2 {
      %cst_10 = arith.constant 0.000000e+00 : f32
      %13 = vector.broadcast %cst_10 : f32 to vector<32x128xf32>
      %c0_11 = arith.constant 0 : index
      %c0_12 = arith.constant 0 : index
      %14 = vector.load %arg10[%c0_11, %c0_12] : memref<32x128xf32, #tpu.memory_space<vmem>>, vector<32x128xf32>
      tpu.vector_store %arg10[%c0_11, %c0_12], %13 {strides = array<i32>} : memref<32x128xf32, #tpu.memory_space<vmem>>, vector<32x128xf32>,
    } else {
    }
    %c0 = arith.constant 0 : index
    %c0_1 = arith.constant 0 : index
    %3 = vector.load %arg2[%c0, %c0_1] : memref<32x128xi8, #tpu.memory_space<vmem>>, vector<32x128xi8>
    %4 = arith.sitofp %3 : vector<32x128xi8> to vector<32x128xbf16>
    %c0_2 = arith.constant 0 : index
    %c0_3 = arith.constant 0 : index
    %5 = vector.load %arg10[%c0_2, %c0_3] : memref<32x128xf32, #tpu.memory_space<vmem>>, vector<32x128xf32>
    %c0_4 = arith.constant 0 : index
    %c0_5 = arith.constant 0 : index
    %6 = vector.load %arg3[%c0_4, %c0_5] : memref<128x128xbf16, #tpu.memory_space<vmem>>, vector<128x128xbf16>
    %cst = arith.constant dense<0.000000e+00> : vector<32x128xf32>
    %7 = tpu.matmul %4, %6, %cst {dimension_numbers = #tpu.dot_dimension_numbers<[1], [0], [0], [1], [0, 0, 1, 1], [], []>} : vector<32x128xbf16>, vector<128x128xbf16>, vector<32x128xf32> -> vector<32x128xf32>
    %8 = arith.addf %5, %7 : vector<32x128xf32>
    %c0_6 = arith.constant 0 : index
    %c0_7 = arith.constant 0 : index
    %9 = vector.load %arg10[%c0_6, %c0_7] : memref<32x128xf32, #tpu.memory_space<vmem>>, vector<32x128xf32>
    tpu.vector_store %arg10[%c0_6, %c0_7], %8 {strides = array<i32>} : memref<32x128xf32, #tpu.memory_space<vmem>>, vector<32x128xf32>,
    %c0_i32_8 = arith.constant 0 : i32
    %10 = arith.cmpi eq, %arg1, %c0_i32_8 : i32
    %11 = arith.extui %10 : i1 to i32
    %c0_i32_9 = arith.constant 0 : i32
    %12 = arith.cmpi ne, %11, %c0_i32_9 : i32
    scf.if %12 {
      %c0_10 = arith.constant 0 : index
      %c0_11 = arith.constant 0 : index
      %13 = vector.load %arg10[%c0_10, %c0_11] : memref<32x128xf32, #tpu.memory_space<vmem>>, vector<32x128xf32>
      %c0_12 = arith.constant 0 : index
      %c0_13 = arith.constant 0 : index
      %14 = vector.load %arg5[%c0_12, %c0_13] : memref<32x1xf32, #tpu.memory_space<vmem>>, vector<32x1xf32>
      %15 = vector.broadcast %14 : vector<32x1xf32> to vector<32x128xf32>
      %16 = arith.mulf %13, %15 : vector<32x128xf32>
      %17 = arith.truncf %16 : vector<32x128xf32> to vector<32x128xbf16>
      %c0_14 = arith.constant 0 : index
      %c0_15 = arith.constant 0 : index
      %18 = vector.load %arg6[%c0_14, %c0_15] : memref<128x128xbf16, #tpu.memory_space<vmem>>, vector<128x128xbf16>
      %cst_16 = arith.constant dense<0.000000e+00> : vector<32x128xf32>
      %19 = tpu.matmul %17, %18, %cst_16 {dimension_numbers = #tpu.dot_dimension_numbers<[1], [0], [0], [1], [0, 0, 1, 1], [], []>} : vector<32x128xbf16>, vector<128x128xbf16>, vector<32x128xf32> -> vector<32x128xf32>
      %c0_17 = arith.constant 0 : index
      %c0_18 = arith.constant 0 : index
      %20 = vector.load %arg4[%c0_17, %c0_18] : memref<32x128xbf16, #tpu.memory_space<vmem>>, vector<32x128xbf16>
      %c0_19 = arith.constant 0 : index
      %c0_20 = arith.constant 0 : index
      %21 = vector.load %arg7[%c0_19, %c0_20] : memref<128x128xbf16, #tpu.memory_space<vmem>>, vector<128x128xbf16>
      %cst_21 = arith.constant dense<0.000000e+00> : vector<32x128xf32>
      %22 = tpu.matmul %20, %21, %cst_21 {dimension_numbers = #tpu.dot_dimension_numbers<[1], [0], [0], [1], [0, 0, 1, 1], [], []>} : vector<32x128xbf16>, vector<128x128xbf16>, vector<32x128xf32> -> vector<32x128xf32>
      %23 = arith.addf %19, %22 : vector<32x128xf32>
      %c0_22 = arith.constant 0 : index
      %c0_23 = arith.constant 0 : index
      %24 = vector.load %arg8[%c0_22, %c0_23] : memref<1x128xf32, #tpu.memory_space<vmem>>, vector<1x128xf32>
      %25 = vector.broadcast %24 : vector<1x128xf32> to vector<32x128xf32>
      %26 = arith.addf %23, %25 : vector<32x128xf32>
      %cst_24 = arith.constant 0.000000e+00 : f32
      %27 = vector.broadcast %cst_24 : f32 to vector<32x128xf32>
      %28 = arith.maximumf %26, %27 : vector<32x128xf32>
      %29 = arith.truncf %28 : vector<32x128xf32> to vector<32x128xbf16>
      %c0_25 = arith.constant 0 : index
      %c0_26 = arith.constant 0 : index
      %30 = vector.load %arg9[%c0_25, %c0_26] : memref<32x128xbf16, #tpu.memory_space<vmem>>, vector<32x128xbf16>
      tpu.vector_store %arg9[%c0_25, %c0_26], %29 {strides = array<i32>} : memref<32x128xbf16, #tpu.memory_space<vmem>>, vector<32x128xbf16>,
    } else {
    }
    return
  }
  func.func @transform_0(%arg0: i32, %arg1: i32) -> (i32, i32) {
    %c0_i32 = arith.constant 0 : i32
    return %arg0, %arg1 : i32, i32
  }
  func.func @transform_1(%arg0: i32, %arg1: i32) -> (i32, i32) {
    %c0_i32 = arith.constant 0 : i32
    %c0_i32_0 = arith.constant 0 : i32
    return %arg1, %c0_i32 : i32, i32
  }
  func.func @transform_2(%arg0: i32, %arg1: i32) -> (i32, i32) {
    %c0_i32 = arith.constant 0 : i32
    %c0_i32_0 = arith.constant 0 : i32
    return %arg0, %c0_i32 : i32, i32
  }
  func.func @transform_3(%arg0: i32, %arg1: i32) -> (i32, i32) {
    %c0_i32 = arith.constant 0 : i32
    %c0_i32_0 = arith.constant 0 : i32
    return %arg0, %c0_i32 : i32, i32
  }
  func.func @transform_4(%arg0: i32, %arg1: i32) -> (i32, i32) {
    %c0_i32 = arith.constant 0 : i32
    %c0_i32_0 = arith.constant 0 : i32
    %c0_i32_1 = arith.constant 0 : i32
    return %c0_i32, %c0_i32_0 : i32, i32
  }
  func.func @transform_5(%arg0: i32, %arg1: i32) -> (i32, i32) {
    %c0_i32 = arith.constant 0 : i32
    %c0_i32_0 = arith.constant 0 : i32
    %c0_i32_1 = arith.constant 0 : i32
    return %c0_i32, %c0_i32_0 : i32, i32
  }
  func.func @transform_6(%arg0: i32, %arg1: i32) -> (i32, i32) {
    %c0_i32 = arith.constant 0 : i32
    %c0_i32_0 = arith.constant 0 : i32
    %c0_i32_1 = arith.constant 0 : i32
    return %c0_i32, %c0_i32_0 : i32, i32
  }
  func.func @transform_7(%arg0: i32, %arg1: i32) -> (i32, i32) {
    %c0_i32 = arith.constant 0 : i32
    %c0_i32_0 = arith.constant 0 : i32
    return %arg0, %c0_i32 : i32, i32
  }
}

</mosaic_0001>

<llo_original>
// kernel: tpu_custom_call.1
$region0: #{tpu_custom_call.1}
  #allocation0 [shape = 'u32[]', space=smem, size = 0x4, offset = 0x4, fixed_abs, tag = 'smem constant byte address 0x4 - core index']
  #allocation1 [shape = 'u32[72,128]{1,0:T(1,128)}', space=vmem, size = 0x9000, scoped, tag = 'internal scratch']
  #allocation2 [shape = 'f32[32,128]{1,0:T(8,128)}', space=vmem, size = 0x4000, scoped, tag = 'scratch operand']
  %s0 = inlined_call_operand.hbm [shape: s8[128,128], index: 0, kind: input, shape index: {}]
  %s1 = inlined_call_operand.vmem [shape: bf16[128,128], index: 1, kind: input, shape index: {}]
  %s2 = inlined_call_operand.vmem [shape: bf16[128,128], index: 2, kind: input, shape index: {}]
  %s3 = inlined_call_operand.vmem [shape: f32[128,1], index: 3, kind: input, shape index: {}]
  %s4 = inlined_call_operand.hbm [shape: bf16[128,128], index: 4, kind: input, shape index: {}]
  %s5 = inlined_call_operand.hbm [shape: bf16[128,128], index: 5, kind: input, shape index: {}]
  %s6 = inlined_call_operand.vmem [shape: f32[1,128], index: 6, kind: input, shape index: {}]
  %s7 = inlined_call_operand.hbm [shape: bf16[128,128], index: 7, kind: output, shape index: {}]
  %s8 = sld [smem:[#allocation0]]
  $region81: #{tpu_custom_call.1} parent=0
    _
  %s10 = ssub.s32 1, %s8
  %s11 = scalar_select 0, %s10, %s8
  $region1: #{tpu_custom_call.1} parent=0
    #allocation3 [shape = 'u8[8192]{0}', space=vmem, size = 0x2000, scoped, tag = 'input window, operand 0']
    #allocation4 [shape = 's32[2]{0}', space=sflag, size = 0x8, scoped, tag = 'scoped memory for tpu_custom_call.1']
    #allocation5 [shape = 's32[2]{0}', space=sflag, size = 0x8, scoped, tag = 'scoped memory for tpu_custom_call.1']
    #allocation6 [shape = 'u8[32768]{0}', space=vmem, size = 0x8000, scoped, tag = 'input window, operand 4, single buffered']
    #allocation7 [shape = 's32[1]{0}', space=sflag, size = 0x4, scoped, tag = 'scoped memory for tpu_custom_call.1']
    #allocation8 [shape = 'u8[32768]{0}', space=vmem, size = 0x8000, scoped, tag = 'input window, operand 5, single buffered']
    #allocation9 [shape = 'u8[16384]{0}', space=vmem, size = 0x4000, scoped, tag = 'output window, operand 0']
    %12 = vsyncpa [#allocation4], 0
    %s13 = scalar_lea.sflag [#allocation4], 1
    %14 = vsyncpa %s13, 0
    %15 = vsyncpa [#allocation7], 0
    %16 = vsyncpa [#allocation5], 0
    %s17 = scalar_lea.sflag [#allocation5], 1
    %18 = vsyncpa %s17, 0
    loop: start=0, step=1, limit=6
    $region2: #{tpu_custom_call.1} parent=1 // loop_pre_header
      _
    $region3: #{tpu_custom_call.1} parent=1 // loop_header
      %s20 = sphi 0, %s24
      %p21 = scmp.ge.s32.totalorder %s20, 6
      %s27 = sphi 0, %s39
      %s28 = sphi 0, %s35
      %s29 = sphi 0, %s27
      %s30 = sphi 0, %s28
      %s31 = sphi 0, %s29
      %s32 = sphi 0, %s30
      %s44 = sphi 0, %s46
      %s47 = sphi 0, %s44
      %s48 = sphi 0, %s47
      %s64 = sphi 0, %s48
      %s70 = sphi 0, %s72
      %s73 = sphi 0, %s70
      %s74 = sphi 0, %s73
      %s90 = sphi 0, %s74
      %s96 = sphi 0, %s98
      %s99 = sphi 0, %s96
      %s100 = sphi 0, %s99
      %s116 = sphi 0, %s100
      %s122 = sphi 0, %s124
      %s125 = sphi 0, %s122
      %s126 = sphi 0, %s125
      %s142 = sphi 0, %s126
      %s146 = sphi 0, %s146
      %s148 = sphi 0, %s146
      %s149 = sphi 0, %s148
      %s163 = sphi 0, %s149
      %s167 = sphi 0, %s167
      %s169 = sphi 0, %s167
      %s170 = sphi 0, %s169
      %s184 = sphi 0, %s170
      %s188 = sphi 0, %s188
      %s190 = sphi 0, %s188
      %s191 = sphi 0, %s190
      %s205 = sphi 0, %s191
      %s211 = sphi 0, %s213
      %s214 = sphi 0, %s211
      %s215 = sphi 0, %s214
      %s231 = sphi 0, %s215
    $region4: #{tpu_custom_call.1} parent=1 // loop_header_branch
      %23 = sbr.rel (%p21) target = $region8
    $region5: #{tpu_custom_call.1} parent=1 // loop_body
      %s25 = ssub.s32 %s20, 1
      %s26 = ssub.s32 %s20, 2
      %s33 = sadd.s32 1, %s28
      %p34 = scmp.ge.s32.totalorder %s33, 1
      %s35 = scalar_select %p34, 0, %s33
      %s36 = sadd.s32 1, %s27
      %s37 = scalar_select %p34, %s36, %s27
      %p38 = scmp.ge.s32.totalorder %s37, 4
      %s39 = scalar_select %p38, 0, %s37
      %s40 = ssub.s32 %s27, %s39
      %s41 = ssub.s32 %s28, %s35
      %s42 = sor.u32 %s40, %s41
      %p43 = scmp.eq.s32.totalorder %s42, 0
      %s45 = sadd.s32 %s44, 1
      %s46 = scalar_select %p43, %s44, %s45
      %p49 = pneg %p43
      %p50 = scmp.eq.s32.totalorder %s20, 3
      %p51 = por %p49, %p50
      %p52 = scmp.ne.s32.totalorder %s44, %s47
      %p53 = scmp.eq.s32.totalorder %s20, 0
      %p54 = por %p52, %p53
      %p55 = scmp.ne.s32.totalorder %s44, %s47
      %p56 = scmp.eq.s32.totalorder %s25, 3
      %p57 = por %p55, %p56
      %p58 = scmp.ne.s32.totalorder %s47, %s48
      %p59 = scmp.eq.s32.totalorder %s25, 0
      %p60 = por %p58, %p59
      %p61 = scmp.ne.s32.totalorder %s47, %s48
      %p62 = scmp.eq.s32.totalorder %s26, 3
      %p63 = por %p61, %p62
      %p65 = scmp.ne.s32.totalorder %s48, %s64
      %p66 = scmp.eq.s32.totalorder %s26, 0
      %p67 = por %p65, %p66
      %s68 = ssub.s32 %s28, %s35
      %p69 = scmp.eq.s32.totalorder %s68, 0
      %s71 = sadd.s32 %s70, 1
      %s72 = scalar_select %p69, %s70, %s71
      %p75 = pneg %p69
      %p76 = scmp.eq.s32.totalorder %s20, 3
      %p77 = por %p75, %p76
      %p78 = scmp.ne.s32.totalorder %s70, %s73
      %p79 = scmp.eq.s32.totalorder %s20, 0
      %p80 = por %p78, %p79
      %p81 = scmp.ne.s32.totalorder %s70, %s73
      %p82 = scmp.eq.s32.totalorder %s25, 3
      %p83 = por %p81, %p82
      %p84 = scmp.ne.s32.totalorder %s73, %s74
      %p85 = scmp.eq.s32.totalorder %s25, 0
      %p86 = por %p84, %p85
      %p87 = scmp.ne.s32.totalorder %s73, %s74
      %p88 = scmp.eq.s32.totalorder %s26, 3
      %p89 = por %p87, %p88
      %p91 = scmp.ne.s32.totalorder %s74, %s90
      %p92 = scmp.eq.s32.totalorder %s26, 0
      %p93 = por %p91, %p92
      %s94 = ssub.s32 %s27, %s39
      %p95 = scmp.eq.s32.totalorder %s94, 0
      %s97 = sadd.s32 %s96, 1
      %s98 = scalar_select %p95, %s96, %s97
      %p101 = pneg %p95
      %p102 = scmp.eq.s32.totalorder %s20, 3
      %p103 = por %p101, %p102
      %p104 = scmp.ne.s32.totalorder %s96, %s99
      %p105 = scmp.eq.s32.totalorder %s20, 0
      %p106 = por %p104, %p105
      %p107 = scmp.ne.s32.totalorder %s96, %s99
      %p108 = scmp.eq.s32.totalorder %s25, 3
      %p109 = por %p107, %p108
      %p110 = scmp.ne.s32.totalorder %s99, %s100
      %p111 = scmp.eq.s32.totalorder %s25, 0
      %p112 = por %p110, %p111
      %p113 = scmp.ne.s32.totalorder %s99, %s100
      %p114 = scmp.eq.s32.totalorder %s26, 3
      %p115 = por %p113, %p114
      %p117 = scmp.ne.s32.totalorder %s100, %s116
      %p118 = scmp.eq.s32.totalorder %s26, 0
      %p119 = por %p117, %p118
      %s120 = ssub.s32 %s27, %s39
      %p121 = scmp.eq.s32.totalorder %s120, 0
      %s123 = sadd.s32 %s122, 1
      %s124 = scalar_select %p121, %s122, %s123
      %p127 = pneg %p121
      %p128 = scmp.eq.s32.totalorder %s20, 3
      %p129 = por %p127, %p128
      %p130 = scmp.ne.s32.totalorder %s122, %s125
      %p131 = scmp.eq.s32.totalorder %s20, 0
      %p132 = por %p130, %p131
      %p133 = scmp.ne.s32.totalorder %s122, %s125
      %p134 = scmp.eq.s32.totalorder %s25, 3
      %p135 = por %p133, %p134
      %p136 = scmp.ne.s32.totalorder %s125, %s126
      %p137 = scmp.eq.s32.totalorder %s25, 0
      %p138 = por %p136, %p137
      %p139 = scmp.ne.s32.totalorder %s125, %s126
      %p140 = scmp.eq.s32.totalorder %s26, 3
      %p141 = por %p139, %p140
      %p143 = scmp.ne.s32.totalorder %s126, %s142
      %p144 = scmp.eq.s32.totalorder %s26, 0
      %p145 = por %p143, %p144
      %s147 = sadd.s32 %s146, 1
      %p150 = scmp.eq.s32.totalorder %s20, 3
      %p151 = scmp.ne.s32.totalorder %s146, %s148
      %p152 = scmp.eq.s32.totalorder %s20, 0
      %p153 = por %p151, %p152
      %p154 = scmp.ne.s32.totalorder %s146, %s148
      %p155 = scmp.eq.s32.totalorder %s25, 3
      %p156 = por %p154, %p155
      %p157 = scmp.ne.s32.totalorder %s148, %s149
      %p158 = scmp.eq.s32.totalorder %s25, 0
      %p159 = por %p157, %p158
      %p160 = scmp.ne.s32.totalorder %s148, %s149
      %p161 = scmp.eq.s32.totalorder %s26, 3
      %p162 = por %p160, %p161
      %p164 = scmp.ne.s32.totalorder %s149, %s163
      %p165 = scmp.eq.s32.totalorder %s26, 0
      %p166 = por %p164, %p165
      %s168 = sadd.s32 %s167, 1
      %p171 = scmp.eq.s32.totalorder %s20, 3
      %p172 = scmp.ne.s32.totalorder %s167, %s169
      %p173 = scmp.eq.s32.totalorder %s20, 0
      %p174 = por %p172, %p173
      %p175 = scmp.ne.s32.totalorder %s167, %s169
      %p176 = scmp.eq.s32.totalorder %s25, 3
      %p177 = por %p175, %p176
      %p178 = scmp.ne.s32.totalorder %s169, %s170
      %p179 = scmp.eq.s32.totalorder %s25, 0
      %p180 = por %p178, %p179
      %p181 = scmp.ne.s32.totalorder %s169, %s170
      %p182 = scmp.eq.s32.totalorder %s26, 3
      %p183 = por %p181, %p182
      %p185 = scmp.ne.s32.totalorder %s170, %s184
      %p186 = scmp.eq.s32.totalorder %s26, 0
      %p187 = por %p185, %p186
      %s189 = sadd.s32 %s188, 1
      %p192 = scmp.eq.s32.totalorder %s20, 3
      %p193 = scmp.ne.s32.totalorder %s188, %s190
      %p194 = scmp.eq.s32.totalorder %s20, 0
      %p195 = por %p193, %p194
      %p196 = scmp.ne.s32.totalorder %s188, %s190
      %p197 = scmp.eq.s32.totalorder %s25, 3
      %p198 = por %p196, %p197
      %p199 = scmp.ne.s32.totalorder %s190, %s191
      %p200 = scmp.eq.s32.totalorder %s25, 0
      %p201 = por %p199, %p200
      %p202 = scmp.ne.s32.totalorder %s190, %s191
      %p203 = scmp.eq.s32.totalorder %s26, 3
      %p204 = por %p202, %p203
      %p206 = scmp.ne.s32.totalorder %s191, %s205
      %p207 = scmp.eq.s32.totalorder %s26, 0
      %p208 = por %p206, %p207
      %s209 = ssub.s32 %s27, %s39
      %p210 = scmp.eq.s32.totalorder %s209, 0
      %s212 = sadd.s32 %s211, 1
      %s213 = scalar_select %p210, %s211, %s212
      %p216 = pneg %p210
      %p217 = scmp.eq.s32.totalorder %s20, 3
      %p218 = por %p216, %p217
      %p219 = scmp.ne.s32.totalorder %s211, %s214
      %p220 = scmp.eq.s32.totalorder %s20, 0
      %p221 = por %p219, %p220
      %p222 = scmp.ne.s32.totalorder %s211, %s214
      %p223 = scmp.eq.s32.totalorder %s25, 3
      %p224 = por %p222, %p223
      %p225 = scmp.ne.s32.totalorder %s214, %s215
      %p226 = scmp.eq.s32.totalorder %s25, 0
      %p227 = por %p225, %p226
      %p228 = scmp.ne.s32.totalorder %s214, %s215
      %p229 = scmp.eq.s32.totalorder %s26, 3
      %p230 = por %p228, %p229
      %p232 = scmp.ne.s32.totalorder %s215, %s231
      %p233 = scmp.eq.s32.totalorder %s26, 0
      %p234 = por %p232, %p233
      %p235 = scmp.le.s32.totalorder 1, %s20
      %p236 = scmp.lt.s32.totalorder %s20, 5
      %p237 = pnand %p235, %p236
      %p238 = pneg %p237
      // Predicated region
      $region9: #{tpu_custom_call.1} parent=5 // pred_check
        _
      $region10: #{tpu_custom_call.1} parent=5 // pred_check_branch
        %240 = sbr.rel (%p237) target = $region12
      $region11: #{tpu_custom_call.1} parent=5 // pred_region
        %s241 = ssub.s32 %s20, 1
        // Predicated region
        $region13: #{tpu_custom_call.1} parent=11 // pred_check
          %p242 = pneg %p86
        $region14: #{tpu_custom_call.1} parent=11 // pred_check_branch
          %244 = sbr.rel (%p242) target = $region16
        $region15: #{tpu_custom_call.1} parent=11 // pred_region
          %s245 = smul.u32 16, %s30
          %p246 = scmp.lt.s32.totalorder %s245, 15
          %s247 = scalar_select %p246, %s245, 15
          %s248 = smul.addr %s247, 4
          %s249 = scalar_lea.vmem %s1, %s248
          %s250 = smul.u32 16, %s30
        $region16: #{tpu_custom_call.1} parent=11 // pred_fallthru
          _
        // Predicated region
        $region17: #{tpu_custom_call.1} parent=11 // pred_check
          %p251 = pneg %p159
        $region18: #{tpu_custom_call.1} parent=11 // pred_check_branch
          %253 = sbr.rel (%p251) target = $region20
        $region19: #{tpu_custom_call.1} parent=11 // pred_region
          %255 = vsyncadd [#allocation7], 0
          %s256 = sshll.u32 %s4, 4
          %s257 = int_to_ptr.hbm [resolvable:$true] %s256
          %s258 = sshll.u32 [#allocation6], 4
          %s259 = int_to_ptr.vmem [resolvable:$true] %s258
          %264 = dma.hbm_to_vmem [thread:$0]  %s257, 1024, %s259, [#allocation7], 64, 64, 4
        $region20: #{tpu_custom_call.1} parent=11 // pred_fallthru
          _
        // Predicated region
        $region21: #{tpu_custom_call.1} parent=11 // pred_check
          %p265 = pneg %p180
        $region22: #{tpu_custom_call.1} parent=11 // pred_check_branch
          %267 = sbr.rel (%p265) target = $region24
        $region23: #{tpu_custom_call.1} parent=11 // pred_region
          %269 = vsyncadd [#allocation7], 0
          %s270 = sshll.u32 %s5, 4
          %s271 = int_to_ptr.hbm [resolvable:$true] %s270
          %s272 = sshll.u32 [#allocation8], 4
          %s273 = int_to_ptr.vmem [resolvable:$true] %s272
          %278 = dma.hbm_to_vmem [thread:$0]  %s271, 1024, %s273, [#allocation7], 64, 64, 4
        $region24: #{tpu_custom_call.1} parent=11 // pred_fallthru
          _
        // Predicated region
        $region25: #{tpu_custom_call.1} parent=11 // pred_check
          %p279 = pneg %p201
        $region26: #{tpu_custom_call.1} parent=11 // pred_check_branch
          %281 = sbr.rel (%p279) target = $region28
        $region27: #{tpu_custom_call.1} parent=11 // pred_region
          _
        $region28: #{tpu_custom_call.1} parent=11 // pred_fallthru
          _
      $region12: #{tpu_custom_call.1} parent=5 // pred_fallthru
        _
      %p282 = scmp.lt.s32.totalorder %s20, 4
      // Predicated region
      $region29: #{tpu_custom_call.1} parent=5 // pred_check
        %p283 = pneg %p282
      $region30: #{tpu_custom_call.1} parent=5 // pred_check_branch
        %285 = sbr.rel (%p283) target = $region32
      $region31: #{tpu_custom_call.1} parent=5 // pred_region
        // Predicated region
        $region33: #{tpu_custom_call.1} parent=31 // pred_check
          %p286 = pneg %p54
        $region34: #{tpu_custom_call.1} parent=31 // pred_check_branch
          %288 = sbr.rel (%p286) target = $region36
        $region35: #{tpu_custom_call.1} parent=31 // pred_region
          %s289 = sand.u32 %s44, 1
          %s290 = scalar_lea.sflag [#allocation4], %s289
          %s291 = sand.u32 %s44, 1
          %s292 = smul.addr %s291, 8
          %s293 = scalar_lea.vmem [#allocation3], %s292
          %295 = vsyncadd %s290, 0
          %s296 = sadd.s32 %s28, %s27
          %s297 = smul.addr %s296, 8
          %s298 = scalar_lea.hbm %s0, %s297
          %s300 = sshll.u32 %s298, 4
          %s301 = int_to_ptr.hbm [resolvable:$true] %s300
          %s302 = sshll.u32 %s293, 4
          %s303 = int_to_ptr.vmem [resolvable:$true] %s302
          %305 = dma.hbm_to_vmem [thread:$0]  %s301, 128, %s303, %s290
        $region36: #{tpu_custom_call.1} parent=31 // pred_fallthru
          _
        // Predicated region
        $region37: #{tpu_custom_call.1} parent=31 // pred_check
          %p306 = pneg %p106
        $region38: #{tpu_custom_call.1} parent=31 // pred_check_branch
          %308 = sbr.rel (%p306) target = $region40
        $region39: #{tpu_custom_call.1} parent=31 // pred_region
          %s309 = smul.u32 4, %s27
          %p310 = scmp.lt.s32.totalorder %s309, 15
          %s311 = scalar_select %p310, %s309, 15
          %s312 = smul.addr %s311, 4
          %s313 = scalar_lea.vmem %s2, %s312
          %s314 = smul.u32 4, %s27
        $region40: #{tpu_custom_call.1} parent=31 // pred_fallthru
          _
        // Predicated region
        $region41: #{tpu_custom_call.1} parent=31 // pred_check
          %p315 = pneg %p132
        $region42: #{tpu_custom_call.1} parent=31 // pred_check_branch
          %317 = sbr.rel (%p315) target = $region44
        $region43: #{tpu_custom_call.1} parent=31 // pred_region
          %s318 = smul.u32 4, %s27
          %p319 = scmp.lt.s32.totalorder %s318, 15
          %s320 = scalar_select %p319, %s318, 15
          %s321 = smul.addr %s320, 8
          %s322 = scalar_lea.vmem %s3, %s321
          %s323 = smul.u32 4, %s27
        $region44: #{tpu_custom_call.1} parent=31 // pred_fallthru
          _
      $region32: #{tpu_custom_call.1} parent=5 // pred_fallthru
        _
      %p324 = scmp.le.s32.totalorder 1, %s20
      %p325 = scmp.lt.s32.totalorder %s20, 5
      %p326 = pnand %p324, %p325
      %p327 = pneg %p326
      // Predicated region
      $region45: #{tpu_custom_call.1} parent=5 // pred_check
        _
      $region46: #{tpu_custom_call.1} parent=5 // pred_check_branch
        %329 = sbr.rel (%p326) target = $region48
      $region47: #{tpu_custom_call.1} parent=5 // pred_region
        %s330 = ssub.s32 %s20, 1
        %s331 = sand.u32 %s47, 1
        %s332 = scalar_lea.sflag [#allocation4], %s331
        %s333 = sand.u32 %s47, 1
        %s334 = smul.addr %s333, 8
        %s335 = scalar_lea.vmem [#allocation3], %s334
        // Predicated region
        $region49: #{tpu_custom_call.1} parent=47 // pred_check
          %p336 = pneg %p60
        $region50: #{tpu_custom_call.1} parent=47 // pred_check_branch
          %338 = sbr.rel (%p336) target = $region52
        $region51: #{tpu_custom_call.1} parent=47 // pred_region
          %340 = dma.done %s332, 128
        $region52: #{tpu_custom_call.1} parent=47 // pred_fallthru
          _
        // Predicated region
        $region53: #{tpu_custom_call.1} parent=47 // pred_check
          %p341 = pneg %p159
        $region54: #{tpu_custom_call.1} parent=47 // pred_check_branch
          %343 = sbr.rel (%p341) target = $region56
        $region55: #{tpu_custom_call.1} parent=47 // pred_region
          %345 = dma.done [#allocation7], 1024
        $region56: #{tpu_custom_call.1} parent=47 // pred_fallthru
          _
        // Predicated region
        $region57: #{tpu_custom_call.1} parent=47 // pred_check
          %p346 = pneg %p180
        $region58: #{tpu_custom_call.1} parent=47 // pred_check_branch
          %348 = sbr.rel (%p346) target = $region60
        $region59: #{tpu_custom_call.1} parent=47 // pred_region
          %350 = dma.done [#allocation7], 1024
        $region60: #{tpu_custom_call.1} parent=47 // pred_fallthru
          _
        %s351 = sand.u32 %s47, 1
        %s352 = scalar_lea.sflag [#allocation4], %s351
        %s353 = sand.u32 %s47, 1
        %s354 = smul.addr %s353, 8
        %s355 = scalar_lea.vmem [#allocation3], %s354
        %p356 = pneg %p60
        %p357 = pneg %p57
        %s358 = smul.u32 16, %s30
        %p359 = scmp.lt.s32.totalorder %s358, 15
        %s360 = scalar_select %p359, %s358, 15
        %s361 = smul.addr %s360, 4
        %s362 = scalar_lea.vmem %s1, %s361
        %p363 = pneg %p86
        %p364 = pneg %p83
        %s365 = smul.u32 4, %s29
        %p366 = scmp.lt.s32.totalorder %s365, 15
        %s367 = scalar_select %p366, %s365, 15
        %s368 = smul.addr %s367, 4
        %s369 = scalar_lea.vmem %s2, %s368
        %p370 = pneg %p112
        %p371 = pneg %p109
        %s372 = smul.u32 4, %s29
        %p373 = scmp.lt.s32.totalorder %s372, 15
        %s374 = scalar_select %p373, %s372, 15
        %s375 = smul.addr %s374, 8
        %s376 = scalar_lea.vmem %s3, %s375
        %p377 = pneg %p138
        %p378 = pneg %p135
        %p379 = pneg %p159
        %p380 = pneg %p156
        %p381 = pneg %p180
        %p382 = pneg %p177
        %p383 = pneg %p201
        %p384 = pneg %p198
        %p385 = pneg %p227
        %p386 = pneg %p224
        %s387 = sand.u32 %s214, 1
        %s388 = scalar_lea.sflag [#allocation5], %s387
        %s389 = sand.u32 %s214, 1
        %s390 = smul.addr %s389, 16
        %s391 = scalar_lea.vmem [#allocation9], %s390
        %s392 = smul.u32 16, %s30
        %p393 = scmp.lt.s32.totalorder %s392, 15
        %s394 = scalar_select %p393, %s392, 15
        %s395 = smul.addr %s394, 4
        %s396 = scalar_lea.vmem %s1, %s395
        %s397 = smul.u32 16, %s30
        %s398 = smul.u32 4, %s29
        %p399 = scmp.lt.s32.totalorder %s398, 15
        %s400 = scalar_select %p399, %s398, 15
        %s401 = smul.addr %s400, 4
        %s402 = scalar_lea.vmem %s2, %s401
        %s403 = smul.u32 4, %s29
        %s404 = smul.u32 4, %s29
        %p405 = scmp.lt.s32.totalorder %s404, 15
        %s406 = scalar_select %p405, %s404, 15
        %s407 = smul.addr %s406, 8
        %s408 = scalar_lea.vmem %s3, %s407
        %s409 = smul.u32 4, %s29
        %s410 = smul.u32 4, %s29
        %p411 = scmp.eq.s32.totalorder %s30, 0
        // Predicated region
        $region61: #{tpu_custom_call.1} parent=47 // pred_check
          %p412 = pneg %p411
        $region62: #{tpu_custom_call.1} parent=47 // pred_check_branch
          %414 = sbr.rel (%p412) target = $region64
        $region63: #{tpu_custom_call.1} parent=47 // pred_region
          %415 = vst [vmem:[#allocation2] sm:$0xff] 0.0
          %416 = vst [vmem:[#allocation2 + $0x8] sm:$0xff] 0.0
          %417 = vst [vmem:[#allocation2 + $0x10] sm:$0xff] 0.0
          %418 = vst [vmem:[#allocation2 + $0x18] sm:$0xff] 0.0
        $region64: #{tpu_custom_call.1} parent=47 // pred_fallthru
          _
        %v419 = vld [vmem:[%s335] sm:$0xff]
        %v420 = vunpack.c.0.s8 %v419
        %v421 = vunpack.c.1.s8 %v419
        %v422 = vunpack.c.2.s8 %v419
        %v423 = vunpack.c.3.s8 %v419
        %v424 = vcvt.s32.f32 %v420
        %v425 = vcvt.s32.f32 %v421
        %v426 = vcvt.s32.f32 %v422
        %v427 = vcvt.s32.f32 %v423
        %v428 = vpack.c.bf16 %v425, %v424
        %v429 = vpack.c.bf16 %v427, %v426
        %v430 = vld [vmem:[#allocation2] sm:$0xff]
        %v431 = vld [vmem:[#allocation2 + $0x8] sm:$0xff]
        %v432 = vld [vmem:[#allocation2 + $0x10] sm:$0xff]
        %v433 = vld [vmem:[#allocation2 + $0x18] sm:$0xff]
        %v434 = vld [vmem:[%s396] sm:$0xf]
        %v435 = vld [vmem:[%s396 + $0x4] sm:$0xf]
        %v436 = vld [vmem:[%s396 + $0x8] sm:$0xf]
        %v437 = vld [vmem:[%s396 + $0xc] sm:$0xf]
        %v438 = vld [vmem:[%s396 + $0x10] sm:$0xf]
        %v439 = vld [vmem:[%s396 + $0x14] sm:$0xf]
        %v440 = vld [vmem:[%s396 + $0x18] sm:$0xf]
        %v441 = vld [vmem:[%s396 + $0x1c] sm:$0xf]
        %v442 = vld [vmem:[%s396 + $0x20] sm:$0xf]
        %v443 = vld [vmem:[%s396 + $0x24] sm:$0xf]
        %v444 = vld [vmem:[%s396 + $0x28] sm:$0xf]
        %v445 = vld [vmem:[%s396 + $0x2c] sm:$0xf]
        %v446 = vld [vmem:[%s396 + $0x30] sm:$0xf]
        %v447 = vld [vmem:[%s396 + $0x34] sm:$0xf]
        %v448 = vld [vmem:[%s396 + $0x38] sm:$0xf]
        %v449 = vld [vmem:[%s396 + $0x3c] sm:$0xf]
        %v466 = vunpack.c.l.b16 %v434
        %v467 = vunpack.c.l.b16 %v435
        %v468 = vunpack.c.l.b16 %v436
        %v469 = vunpack.c.l.b16 %v437
        %v470 = vunpack.c.l.b16 %v438
        %v471 = vunpack.c.l.b16 %v439
        %v472 = vunpack.c.l.b16 %v440
        %v473 = vunpack.c.l.b16 %v441
        %v474 = vunpack.c.l.b16 %v442
        %v475 = vunpack.c.l.b16 %v443
        %v476 = vunpack.c.l.b16 %v444
        %v477 = vunpack.c.l.b16 %v445
        %v478 = vunpack.c.l.b16 %v446
        %v479 = vunpack.c.l.b16 %v447
        %v480 = vunpack.c.l.b16 %v448
        %v481 = vunpack.c.l.b16 %v449
        %v482 = vpack.c.b16 %v467, %v466
        %v483 = vpack.c.b16 %v469, %v468
        %v484 = vpack.c.b16 %v471, %v470
        %v485 = vpack.c.b16 %v473, %v472
        %v486 = vpack.c.b16 %v475, %v474
        %v487 = vpack.c.b16 %v477, %v476
        %v488 = vpack.c.b16 %v479, %v478
        %v489 = vpack.c.b16 %v481, %v480
        %498 = vmatpush.bf16.msra.mxu0 %v489
        %499 = vmatpush.bf16.msra.mxu0 %v488
        %500 = vmatpush.bf16.msra.mxu0 %v487
        %501 = vmatpush.bf16.msra.mxu0 %v486
        %502 = vmatpush.bf16.msra.mxu0 %v485
        %503 = vmatpush.bf16.msra.mxu0 %v484
        %504 = vmatpush.bf16.msra.mxu0 %v483
        %505 = vmatpush.bf16.msra.mxu0 %v482
        %506 = vmatmul.bf16.gmra.mxu0 %v428
        %v507 = vpop.f32.mrf.mxu0
        %v508 = vadd.f32 0.0, %v507
        %v509 = vpop.f32.mrf.mxu0
        %v510 = vadd.f32 0.0, %v509
        %511 = vmatmul.bf16.gmra.mxu0 %v429
        %v512 = vpop.f32.mrf.mxu0
        %v513 = vadd.f32 0.0, %v512
        %v514 = vpop.f32.mrf.mxu0
        %v515 = vadd.f32 0.0, %v514
        %516 = vdwg.mxu0
        %v517 = vadd.f32 %v430, %v508
        %v518 = vadd.f32 %v431, %v510
        %v519 = vadd.f32 %v432, %v513
        %v520 = vadd.f32 %v433, %v515
        %521 = vst [vmem:[#allocation2] sm:$0xff] %v517
        %522 = vst [vmem:[#allocation2 + $0x8] sm:$0xff] %v518
        %523 = vst [vmem:[#allocation2 + $0x10] sm:$0xff] %v519
        %524 = vst [vmem:[#allocation2 + $0x18] sm:$0xff] %v520
        // Predicated region
        $region65: #{tpu_custom_call.1} parent=47 // pred_check
          %p525 = pneg %p411
        $region66: #{tpu_custom_call.1} parent=47 // pred_check_branch
          %527 = sbr.rel (%p525) target = $region68
        $region67: #{tpu_custom_call.1} parent=47 // pred_region
          %v528 = vld [vmem:[#allocation2] sm:$0xff]
          %v529 = vld [vmem:[#allocation2 + $0x8] sm:$0xff]
          %v530 = vld [vmem:[#allocation2 + $0x10] sm:$0xff]
          %v531 = vld [vmem:[#allocation2 + $0x18] sm:$0xff]
          %v532 = vld [vmem:[%s408] sm:$0xff]
          %v533 = vld [vmem:[%s408 + $0x8] sm:$0xff]
          %v534 = vld [vmem:[%s408 + $0x10] sm:$0xff]
          %v535 = vld [vmem:[%s408 + $0x18] sm:$0xff]
          %537 = vset.pattern.permute.xlu0 0
          %538 = vperm.xlu0 %537, %v532
          %v539 = vpop.permute.xlu0 %538
          %542 = vset.pattern.permute.xlu0 0
          %543 = vperm.xlu0 %542, %v533
          %v544 = vpop.permute.xlu0 %543
          %547 = vset.pattern.permute.xlu0 0
          %548 = vperm.xlu0 %547, %v534
          %v549 = vpop.permute.xlu0 %548
          %552 = vset.pattern.permute.xlu0 0
          %553 = vperm.xlu0 %552, %v535
          %v554 = vpop.permute.xlu0 %553
          %v556 = vmul.f32 %v528, %v539
          %v557 = vmul.f32 %v529, %v544
          %v558 = vmul.f32 %v530, %v549
          %v559 = vmul.f32 %v531, %v554
          %v560 = vpack.c.bf16 %v557, %v556
          %v561 = vpack.c.bf16 %v559, %v558
          %v562 = vld [vmem:[#allocation6] sm:$0xf]
          %v563 = vld [vmem:[#allocation6 + $0x4] sm:$0xf]
          %v564 = vld [vmem:[#allocation6 + $0x8] sm:$0xf]
          %v565 = vld [vmem:[#allocation6 + $0xc] sm:$0xf]
          %v566 = vld [vmem:[#allocation6 + $0x10] sm:$0xf]
          %v567 = vld [vmem:[#allocation6 + $0x14] sm:$0xf]
          %v568 = vld [vmem:[#allocation6 + $0x18] sm:$0xf]
          %v569 = vld [vmem:[#allocation6 + $0x1c] sm:$0xf]
          %v570 = vld [vmem:[#allocation6 + $0x20] sm:$0xf]
          %v571 = vld [vmem:[#allocation6 + $0x24] sm:$0xf]
          %v572 = vld [vmem:[#allocation6 + $0x28] sm:$0xf]
          %v573 = vld [vmem:[#allocation6 + $0x2c] sm:$0xf]
          %v574 = vld [vmem:[#allocation6 + $0x30] sm:$0xf]
          %v575 = vld [vmem:[#allocation6 + $0x34] sm:$0xf]
          %v576 = vld [vmem:[#allocation6 + $0x38] sm:$0xf]
          %v577 = vld [vmem:[#allocation6 + $0x3c] sm:$0xf]
          %v578 = vld [vmem:[%s402] sm:$0xf]
          %v579 = vld [vmem:[%s402 + $0x4] sm:$0xf]
          %v580 = vld [vmem:[%s402 + $0x8] sm:$0xf]
          %v581 = vld [vmem:[%s402 + $0xc] sm:$0xf]
          %v582 = vld [vmem:[#allocation8] sm:$0xf]
          %v583 = vld [vmem:[#allocation8 + $0x4] sm:$0xf]
          %v584 = vld [vmem:[#allocation8 + $0x8] sm:$0xf]
          %v585 = vld [vmem:[#allocation8 + $0xc] sm:$0xf]
          %v586 = vld [vmem:[#allocation8 + $0x10] sm:$0xf]
          %v587 = vld [vmem:[#allocation8 + $0x14] sm:$0xf]
          %v588 = vld [vmem:[#allocation8 + $0x18] sm:$0xf]
          %v589 = vld [vmem:[#allocation8 + $0x1c] sm:$0xf]
          %v590 = vld [vmem:[#allocation8 + $0x20] sm:$0xf]
          %v591 = vld [vmem:[#allocation8 + $0x24] sm:$0xf]
          %v592 = vld [vmem:[#allocation8 + $0x28] sm:$0xf]
          %v593 = vld [vmem:[#allocation8 + $0x2c] sm:$0xf]
          %v594 = vld [vmem:[#allocation8 + $0x30] sm:$0xf]
          %v595 = vld [vmem:[#allocation8 + $0x34] sm:$0xf]
          %v596 = vld [vmem:[#allocation8 + $0x38] sm:$0xf]
          %v597 = vld [vmem:[#allocation8 + $0x3c] sm:$0xf]
          %v602 = vunpack.c.l.b16 %v578
          %v603 = vunpack.c.l.b16 %v579
          %v604 = vunpack.c.l.b16 %v580
          %v605 = vunpack.c.l.b16 %v581
          %v606 = vpack.c.b16 %v603, %v602
          %v607 = vpack.c.b16 %v605, %v604
          %v626 = vunpack.c.l.b16 %v582
          %v627 = vunpack.c.l.b16 %v583
          %v628 = vunpack.c.l.b16 %v584
          %v629 = vunpack.c.l.b16 %v585
          %v630 = vunpack.c.l.b16 %v586
          %v631 = vunpack.c.l.b16 %v587
          %v632 = vunpack.c.l.b16 %v588
          %v633 = vunpack.c.l.b16 %v589
          %v634 = vunpack.c.l.b16 %v590
          %v635 = vunpack.c.l.b16 %v591
          %v636 = vunpack.c.l.b16 %v592
          %v637 = vunpack.c.l.b16 %v593
          %v638 = vunpack.c.l.b16 %v594
          %v639 = vunpack.c.l.b16 %v595
          %v640 = vunpack.c.l.b16 %v596
          %v641 = vunpack.c.l.b16 %v597
          %v642 = vpack.c.b16 %v627, %v626
          %v643 = vpack.c.b16 %v629, %v628
          %v644 = vpack.c.b16 %v631, %v630
          %v645 = vpack.c.b16 %v633, %v632
          %v646 = vpack.c.b16 %v635, %v634
          %v647 = vpack.c.b16 %v637, %v636
          %v648 = vpack.c.b16 %v639, %v638
          %v649 = vpack.c.b16 %v641, %v640
          %658 = vmatpush.bf16.msra.mxu0 %v649
          %659 = vmatpush.bf16.msra.mxu0 %v648
          %660 = vmatpush.bf16.msra.mxu0 %v647
          %661 = vmatpush.bf16.msra.mxu0 %v646
          %662 = vmatpush.bf16.msra.mxu0 %v645
          %663 = vmatpush.bf16.msra.mxu0 %v644
          %664 = vmatpush.bf16.msra.mxu0 %v643
          %665 = vmatpush.bf16.msra.mxu0 %v642
          %666 = vmatmul.bf16.gmra.mxu0 %v606
          %v667 = vpop.f32.mrf.mxu0
          %v668 = vadd.f32 0.0, %v667
          %v669 = vpop.f32.mrf.mxu0
          %v670 = vadd.f32 0.0, %v669
          %671 = vmatmul.bf16.gmra.mxu0 %v607
          %v672 = vpop.f32.mrf.mxu0
          %v673 = vadd.f32 0.0, %v672
          %v674 = vpop.f32.mrf.mxu0
          %v675 = vadd.f32 0.0, %v674
          %676 = vdwg.mxu0
          %v693 = vunpack.c.l.b16 %v562
          %v694 = vunpack.c.l.b16 %v563
          %v695 = vunpack.c.l.b16 %v564
          %v696 = vunpack.c.l.b16 %v565
          %v697 = vunpack.c.l.b16 %v566
          %v698 = vunpack.c.l.b16 %v567
          %v699 = vunpack.c.l.b16 %v568
          %v700 = vunpack.c.l.b16 %v569
          %v701 = vunpack.c.l.b16 %v570
          %v702 = vunpack.c.l.b16 %v571
          %v703 = vunpack.c.l.b16 %v572
          %v704 = vunpack.c.l.b16 %v573
          %v705 = vunpack.c.l.b16 %v574
          %v706 = vunpack.c.l.b16 %v575
          %v707 = vunpack.c.l.b16 %v576
          %v708 = vunpack.c.l.b16 %v577
          %v709 = vpack.c.b16 %v694, %v693
          %v710 = vpack.c.b16 %v696, %v695
          %v711 = vpack.c.b16 %v698, %v697
          %v712 = vpack.c.b16 %v700, %v699
          %v713 = vpack.c.b16 %v702, %v701
          %v714 = vpack.c.b16 %v704, %v703
          %v715 = vpack.c.b16 %v706, %v705
          %v716 = vpack.c.b16 %v708, %v707
          %725 = vmatpush.bf16.msra.mxu0 %v716
          %726 = vmatpush.bf16.msra.mxu0 %v715
          %727 = vmatpush.bf16.msra.mxu0 %v714
          %728 = vmatpush.bf16.msra.mxu0 %v713
          %729 = vmatpush.bf16.msra.mxu0 %v712
          %730 = vmatpush.bf16.msra.mxu0 %v711
          %731 = vmatpush.bf16.msra.mxu0 %v710
          %732 = vmatpush.bf16.msra.mxu0 %v709
          %733 = vmatmul.bf16.gmra.mxu0 %v560
          %v734 = vpop.f32.mrf.mxu0
          %v735 = vadd.f32 %v668, %v734
          %v736 = vpop.f32.mrf.mxu0
          %v737 = vadd.f32 %v670, %v736
          %738 = vmatmul.bf16.gmra.mxu0 %v561
          %v739 = vpop.f32.mrf.mxu0
          %v740 = vadd.f32 %v673, %v739
          %v741 = vpop.f32.mrf.mxu0
          %v742 = vadd.f32 %v675, %v741
          %743 = vdwg.mxu0
          %v744 = vld [vmem:[%s6] sm:$0x1]
          %v746 = vperm.slane %v744, 0
          %v748 = vadd.f32 %v735, %v746
          %v749 = vadd.f32 %v737, %v746
          %v750 = vadd.f32 %v740, %v746
          %v751 = vadd.f32 %v742, %v746
          %v752 = vmax.f32 %v748, 0.0
          %v753 = vmax.f32 %v749, 0.0
          %v754 = vmax.f32 %v750, 0.0
          %v755 = vmax.f32 %v751, 0.0
          %v756 = vpack.c.bf16 %v752, %v752
          %v757 = vpack.c.bf16 %v753, %v753
          %v758 = vpack.c.bf16 %v754, %v754
          %v759 = vpack.c.bf16 %v755, %v755
          %760 = vst [vmem:[%s391] sm:$0xf] %v756
          %761 = vst [vmem:[%s391 + $0x4] sm:$0xf] %v757
          %762 = vst [vmem:[%s391 + $0x8] sm:$0xf] %v758
          %763 = vst [vmem:[%s391 + $0xc] sm:$0xf] %v759
        $region68: #{tpu_custom_call.1} parent=47 // pred_fallthru
          _
        %s764 = sand.u32 %s214, 1
        %s765 = scalar_lea.sflag [#allocation5], %s764
        %s766 = sand.u32 %s214, 1
        %s767 = smul.addr %s766, 16
        %s768 = scalar_lea.vmem [#allocation9], %s767
        // Predicated region
        $region69: #{tpu_custom_call.1} parent=47 // pred_check
          %p769 = pneg %p224
        $region70: #{tpu_custom_call.1} parent=47 // pred_check_branch
          %771 = sbr.rel (%p769) target = $region72
        $region71: #{tpu_custom_call.1} parent=47 // pred_region
          %s772 = smul.u32 4, %s29
          %774 = vsyncadd %s765, 0
          %s775 = smul.addr %s772, 4
          %s776 = scalar_lea.hbm %s7, %s775
          %s777 = sshll.u32 %s768, 4
          %s778 = int_to_ptr.vmem [resolvable:$true] %s777
          %s779 = sshll.u32 %s776, 4
          %s780 = int_to_ptr.hbm [resolvable:$true] %s779
          %785 = dma.vmem_to_hbm [thread:$0]  %s778, 256, %s780, %s765, 64, 64, 4
        $region72: #{tpu_custom_call.1} parent=47 // pred_fallthru
          _
      $region48: #{tpu_custom_call.1} parent=5 // pred_fallthru
        _
      %p786 = scmp.le.s32.totalorder 2, %s20
      // Predicated region
      $region73: #{tpu_custom_call.1} parent=5 // pred_check
        %p787 = pneg %p786
      $region74: #{tpu_custom_call.1} parent=5 // pred_check_branch
        %789 = sbr.rel (%p787) target = $region76
      $region75: #{tpu_custom_call.1} parent=5 // pred_region
        %s790 = ssub.s32 %s20, 2
        // Predicated region
        $region77: #{tpu_custom_call.1} parent=75 // pred_check
          %p791 = pneg %p230
        $region78: #{tpu_custom_call.1} parent=75 // pred_check_branch
          %793 = sbr.rel (%p791) target = $region80
        $region79: #{tpu_custom_call.1} parent=75 // pred_region
          %s794 = sand.u32 %s215, 1
          %s795 = scalar_lea.sflag [#allocation5], %s794
          %s796 = sand.u32 %s215, 1
          %s797 = smul.addr %s796, 16
          %s798 = scalar_lea.vmem [#allocation9], %s797
          %800 = dma.done %s795, 256
        $region80: #{tpu_custom_call.1} parent=75 // pred_fallthru
          _
      $region76: #{tpu_custom_call.1} parent=5 // pred_fallthru
        _
    $region6: #{tpu_custom_call.1} parent=1 // loop_footer
      %s24 = sadd.s32 1, %s20
    $region7: #{tpu_custom_call.1} parent=1 // loop_footer_branch
      %19 = sbr.rel target = $region3
    $region8: #{tpu_custom_call.1} parent=1 // loop_exit
      _
    %801 = vsyncpa [#allocation4], 1
    %s802 = scalar_lea.sflag [#allocation4], 1
    %803 = vsyncpa %s802, 1
    %804 = vsyncpa [#allocation7], 1
    %805 = vsyncpa [#allocation5], 1
    %s806 = scalar_lea.sflag [#allocation5], 1
    %807 = vsyncpa %s806, 1

</llo_original>
